<compile_context>
chip_gen: v5e
topology: v5e:2x2
jax: 0.10.0
libtpu: 0.0.40
codegen_flags: <defaults>
</compile_context>

<pallas_src>
import jax
import jax.numpy as jnp
from jax.experimental import pallas as pl
from jax.experimental.pallas import tpu as pltpu

_LANES = 128
_MAX_TILE_ROWS = 2048  # 2048x128 f32 = 1 MiB per input per pipeline buffer


def _make_bce_partial_kernel(tile_rows, total_rows, need_mask):
    """Kernel computing one (8, 128) partial sum of the BCE loss per grid step."""

    def kernel(p_ref, t_ref, o_ref):
        p = p_ref[...].astype(jnp.float32)
        t = t_ref[...].astype(jnp.float32)

        # PyTorch binary_cross_entropy clamps the log terms at -100 *before*
        # the multiply, so t=0 / p=0 corners give 0 * -100 = 0 (never NaN).
        log_p = jnp.maximum(jnp.log(p), -100.0)
        log_1mp = jnp.maximum(jnp.log(1.0 - p), -100.0)
        loss = -(t * log_p + (1.0 - t) * log_1mp)

        if need_mask:
            # Zero out rows of the ragged last block that lie past the array
            # end (their contents are undefined).  jnp.where is a select, so
            # NaN/Inf from garbage data never propagates.
            row0 = pl.program_id(0) * tile_rows
            rid = row0 + jax.lax.broadcasted_iota(
                jnp.int32, (tile_rows, _LANES), 0)
            loss = jnp.where(rid < total_rows, loss, 0.0)

        # Sublane-aligned partial reduce to a single (8, 128) vreg: pure VPU
        # adds (tile_rows // 8 vreg accumulations), no XLU lane reduce here.
        o_ref[0] = loss.reshape(tile_rows // 8, 8, _LANES).sum(axis=0)

    return kernel


def bce_loss(out, batch):
    """Pallas equivalent of
    F.binary_cross_entropy(out, batch, reduction='none').sum() / out.shape[0]
    """
    assert out.shape == batch.shape
    b = out.shape[0]

    # Keep the caller's dtype (bf16 stays bf16 through the DMA); cast happens
    # in-kernel on the VPU.
    p_flat = out.reshape(-1)
    t_flat = batch.reshape(-1)
    n = p_flat.shape[0]

    # Pad only as much as the (rows, 128) reshape requires (and guarantee at
    # least 8 rows so a block never exceeds the array).  For the common case
    # n % 128 == 0 and n >= 1024 this is a pure bitcast reshape: zero copies.
    padded_n = max(((n + _LANES - 1) // _LANES) * _LANES, 8 * _LANES)
    pad = padded_n - n
    if pad:
        # pred=1, target=1  ->  loss = -(1*log(1) + 0*max(log(0), -100)) = 0
        p_flat = jnp.concatenate([p_flat, jnp.ones((pad,), p_flat.dtype)])
        t_flat = jnp.concatenate([t_flat, jnp.ones((pad,), t_flat.dtype)])

    rows = padded_n // _LANES
    p2d = p_flat.reshape(rows, _LANES)
    t2d = t_flat.reshape(rows, _LANES)

    # Tile rows: multiple of 8, never larger than the array (ragged only at
    # the final grid step, which is masked in-kernel).
    tile_rows = min(_MAX_TILE_ROWS, (rows // 8) * 8)
    num_tiles = pl.cdiv(rows, tile_rows)
    need_mask = (rows % tile_rows) != 0

    kernel = _make_bce_partial_kernel(tile_rows, rows, need_mask)

    partials = pl.pallas_call(
        kernel,
        out_shape=jax.ShapeDtypeStruct((num_tiles, 8, _LANES), jnp.float32),
        grid_spec=pltpu.PrefetchScalarGridSpec(
            num_scalar_prefetch=0,
            grid=(num_tiles,),
            in_specs=[
                pl.BlockSpec((tile_rows, _LANES), lambda i: (i, 0)),
                pl.BlockSpec((tile_rows, _LANES), lambda i: (i, 0)),
            ],
            out_specs=pl.BlockSpec((1, 8, _LANES), lambda i: (i, 0, 0)),
        ),
        compiler_params=pltpu.CompilerParams(
            # Independent per-step outputs -> fully parallel grid (lets v7x
            # megacore split the row range across both TensorCores).
            dimension_semantics=("parallel",),
        ),
    )(p2d, t2d)

    # Tiny (num_tiles, 8, 128) reduce + divide-by-batch: wrapper-side glue.
    return jnp.sum(partials) / jnp.float32(b)


if __name__ == "__main__":
    key = jax.random.PRNGKey(0)
    k1, k2, k3, k4 = jax.random.split(key, 4)

    def ref_bce(preds, targets):
        p = preds.astype(jnp.float32)
        t = targets.astype(jnp.float32)
        log_p = jnp.maximum(jnp.log(p), -100.0)
        log_1mp = jnp.maximum(jnp.log(1.0 - p), -100.0)
        return jnp.sum(-(t * log_p + (1.0 - t) * log_1mp)) / preds.shape[0]

    # --- Test 1: exact-fit path (n divisible by 128, single tile) ---
    B, C, H, W = 2, 4, 16, 16
    preds = jax.nn.sigmoid(jax.random.normal(k1, (B, C, H, W), jnp.float32))
    targets = jax.random.uniform(k2, (B, C, H, W), jnp.float32)
    loss = jax.block_until_ready(bce_loss(preds, targets))
    ref = ref_bce(preds, targets)
    assert jnp.allclose(loss, ref, rtol=1e-5, atol=1e-5), (loss, ref)

    # --- Test 2: ragged path (tail pad + masked edge block, multiple tiles) ---
    preds2 = jax.nn.sigmoid(jax.random.normal(k3, (2, 3, 50, 50), jnp.float32))
    targets2 = jax.random.uniform(k4, (2, 3, 50, 50), jnp.float32)
    loss2 = jax.block_until_ready(bce_loss(preds2, targets2))
    ref2 = ref_bce(preds2, targets2)
    assert jnp.allclose(loss2, ref2, rtol=1e-5, atol=1e-5), (loss2, ref2)

    print("KERNEL_OK")
</pallas_src>

<mosaic_0001>
module attributes {stable_mosaic.version = 11 : i64} {
  func.func @kernel(%arg0: i32, %arg1: memref<16x128xf32, #tpu.memory_space<vmem>>, %arg2: memref<16x128xf32, #tpu.memory_space<vmem>>, %arg3: memref<1x8x128xf32, #tpu.memory_space<vmem>>) attributes {dimension_semantics = [#tpu.dimension_semantics<parallel>], iteration_bounds = array<i64: 1>, scalar_prefetch = 0 : i64, scratch_operands = 0 : i64, tpu.core_type = #tpu.core_type<tc>, window_params = [{transform_indices = @transform_0, window_bounds = array<i64: 16, 128>}, {transform_indices = @transform_1, window_bounds = array<i64: 16, 128>}, {transform_indices = @transform_2, window_bounds = array<i64: 1, 8, 128>}]} {
    %c0 = arith.constant 0 : index
    %c0_0 = arith.constant 0 : index
    %0 = vector.load %arg1[%c0, %c0_0] : memref<16x128xf32, #tpu.memory_space<vmem>>, vector<16x128xf32>
    %c0_1 = arith.constant 0 : index
    %c0_2 = arith.constant 0 : index
    %1 = vector.load %arg2[%c0_1, %c0_2] : memref<16x128xf32, #tpu.memory_space<vmem>>, vector<16x128xf32>
    %2 = math.log %0 : vector<16x128xf32>
    %cst = arith.constant -1.000000e+02 : f32
    %3 = vector.broadcast %cst : f32 to vector<16x128xf32>
    %4 = arith.maximumf %2, %3 : vector<16x128xf32>
    %cst_3 = arith.constant 1.000000e+00 : f32
    %5 = vector.broadcast %cst_3 : f32 to vector<16x128xf32>
    %6 = arith.subf %5, %0 : vector<16x128xf32>
    %7 = math.log %6 : vector<16x128xf32>
    %cst_4 = arith.constant -1.000000e+02 : f32
    %8 = vector.broadcast %cst_4 : f32 to vector<16x128xf32>
    %9 = arith.maximumf %7, %8 : vector<16x128xf32>
    %10 = arith.mulf %1, %4 : vector<16x128xf32>
    %cst_5 = arith.constant 1.000000e+00 : f32
    %11 = vector.broadcast %cst_5 : f32 to vector<16x128xf32>
    %12 = arith.subf %11, %1 : vector<16x128xf32>
    %13 = arith.mulf %12, %9 : vector<16x128xf32>
    %14 = arith.addf %10, %13 : vector<16x128xf32>
    %cst_6 = arith.constant 0.000000e+00 : f32
    %15 = vector.broadcast %cst_6 : f32 to vector<16x128xf32>
    %16 = arith.subf %15, %14 : vector<16x128xf32>
    %17 = vector.shape_cast %16 : vector<16x128xf32> to vector<2x8x128xf32>
    %cst_7 = arith.constant dense<0.000000e+00> : vector<8x128xf32>
    %18 = vector.multi_reduction <add>, %17, %cst_7 [0] : vector<2x8x128xf32> to vector<8x128xf32>
    %c0_8 = arith.constant 0 : index
    %c0_9 = arith.constant 0 : index
    %c0_10 = arith.constant 0 : index
    %19 = vector.load %arg3[%c0_8, %c0_9, %c0_10] : memref<1x8x128xf32, #tpu.memory_space<vmem>>, vector<1x8x128xf32>
    %20 = vector.shape_cast %19 : vector<1x8x128xf32> to vector<8x128xf32>
    %21 = vector.shape_cast %18 : vector<8x128xf32> to vector<1x8x128xf32>
    tpu.vector_store %arg3[%c0_8, %c0_9, %c0_10], %21 {strides = array<i32>} : memref<1x8x128xf32, #tpu.memory_space<vmem>>, vector<1x8x128xf32>,
    return
  }
  func.func @transform_0(%arg0: i32) -> (i32, i32) {
    %c0_i32 = arith.constant 0 : i32
    %c0_i32_0 = arith.constant 0 : i32
    return %arg0, %c0_i32 : i32, i32
  }
  func.func @transform_1(%arg0: i32) -> (i32, i32) {
    %c0_i32 = arith.constant 0 : i32
    %c0_i32_0 = arith.constant 0 : i32
    return %arg0, %c0_i32 : i32, i32
  }
  func.func @transform_2(%arg0: i32) -> (i32, i32, i32) {
    %c0_i32 = arith.constant 0 : i32
    %c0_i32_0 = arith.constant 0 : i32
    %c0_i32_1 = arith.constant 0 : i32
    return %arg0, %c0_i32, %c0_i32_0 : i32, i32, i32
  }
}

</mosaic_0001>

<llo_original>
// kernel: tpu_custom_call.1
$region0: #{tpu_custom_call.1}
  #allocation0 [shape = 'u32[]', space=smem, size = 0x4, offset = 0x4, fixed_abs, tag = 'smem constant byte address 0x4 - core index']
  #allocation1 [shape = 'u32[72,128]{1,0:T(1,128)}', space=vmem, size = 0x9000, scoped, tag = 'internal scratch']
  %s0 = inlined_call_operand.hbm [shape: f32[16,128], index: 0, kind: input, shape index: {}]
  %s1 = inlined_call_operand.hbm [shape: f32[16,128], index: 1, kind: input, shape index: {}]
  %s2 = inlined_call_operand.hbm [shape: f32[1,8,128], index: 2, kind: output, shape index: {}]
  %s3 = sld [smem:[#allocation0]]
  $region26: #{tpu_custom_call.1} parent=0
    _
  %s5 = ssub.s32 1, %s3
  %s6 = scalar_select 0, %s5, %s3
  $region1: #{tpu_custom_call.1} parent=0
    #allocation2 [shape = 'u8[8192]{0}', space=vmem, size = 0x2000, scoped, tag = 'input window, operand 0, single buffered']
    #allocation3 [shape = 's32[1]{0}', space=sflag, size = 0x4, scoped, tag = 'scoped memory for tpu_custom_call.1']
    #allocation4 [shape = 's32[1]{0}', space=sflag, size = 0x4, scoped, tag = 'scoped memory for tpu_custom_call.1']
    #allocation5 [shape = 'u8[8192]{0}', space=vmem, size = 0x2000, scoped, tag = 'input window, operand 1, single buffered']
    #allocation6 [shape = 's32[1]{0}', space=sflag, size = 0x4, scoped, tag = 'scoped memory for tpu_custom_call.1']
    #allocation7 [shape = 'u8[4096]{0}', space=vmem, size = 0x1000, scoped, tag = 'output window, operand 0, single buffered']
    %7 = vsyncpa [#allocation3], 0
    %8 = vsyncpa [#allocation6], 0
    %9 = vsyncpa [#allocation4], 0
    // Predicated region
    $region2: #{tpu_custom_call.1} parent=1 // pred_check
      _
    $region3: #{tpu_custom_call.1} parent=1 // pred_check_branch
      %11 = sbr.rel (0) target = $region5
    $region4: #{tpu_custom_call.1} parent=1 // pred_region
      %13 = vsyncadd [#allocation3], 0
      %s14 = sshll.u32 %s0, 4
      %s15 = int_to_ptr.hbm [resolvable:$true] %s14
      %s16 = sshll.u32 [#allocation2], 4
      %s17 = int_to_ptr.vmem [resolvable:$true] %s16
      %22 = dma.hbm_to_vmem [thread:$0]  %s15, 256, %s17, [#allocation3], 128, 128, 8
    $region5: #{tpu_custom_call.1} parent=1 // pred_fallthru
      _
    // Predicated region
    $region6: #{tpu_custom_call.1} parent=1 // pred_check
      _
    $region7: #{tpu_custom_call.1} parent=1 // pred_check_branch
      %24 = sbr.rel (0) target = $region9
    $region8: #{tpu_custom_call.1} parent=1 // pred_region
      %26 = vsyncadd [#allocation6], 0
      %s27 = sshll.u32 %s1, 4
      %s28 = int_to_ptr.hbm [resolvable:$true] %s27
      %s29 = sshll.u32 [#allocation5], 4
      %s30 = int_to_ptr.vmem [resolvable:$true] %s29
      %35 = dma.hbm_to_vmem [thread:$0]  %s28, 256, %s30, [#allocation6], 128, 128, 8
    $region9: #{tpu_custom_call.1} parent=1 // pred_fallthru
      _
    // Predicated region
    $region10: #{tpu_custom_call.1} parent=1 // pred_check
      _
    $region11: #{tpu_custom_call.1} parent=1 // pred_check_branch
      %37 = sbr.rel (0) target = $region13
    $region12: #{tpu_custom_call.1} parent=1 // pred_region
      %39 = dma.done [#allocation3], 256
    $region13: #{tpu_custom_call.1} parent=1 // pred_fallthru
      _
    // Predicated region
    $region14: #{tpu_custom_call.1} parent=1 // pred_check
      _
    $region15: #{tpu_custom_call.1} parent=1 // pred_check_branch
      %41 = sbr.rel (0) target = $region17
    $region16: #{tpu_custom_call.1} parent=1 // pred_region
      %43 = dma.done [#allocation6], 256
    $region17: #{tpu_custom_call.1} parent=1 // pred_fallthru
      _
    %v44 = vld [vmem:[#allocation2] sm:$0xff]
    %v45 = vld [vmem:[#allocation2 + $0x8] sm:$0xff]
    %v46 = vld [vmem:[#allocation5] sm:$0xff]
    %v47 = vld [vmem:[#allocation5 + $0x8] sm:$0xff]
    %v48 = vlog2.pop %v44
    %v49 = vmul.f32 %v48, 0.6931472
    %v50 = vlog2.pop %v45
    %v51 = vmul.f32 %v50, 0.6931472
    %v52 = vmax.f32 %v49, -100.0
    %v53 = vmax.f32 %v51, -100.0
    %v54 = vsub.f32 1.0, %v44
    %v55 = vsub.f32 1.0, %v45
    %v56 = vlog2.pop %v54
    %v57 = vmul.f32 %v56, 0.6931472
    %v58 = vlog2.pop %v55
    %v59 = vmul.f32 %v58, 0.6931472
    %v60 = vmax.f32 %v57, -100.0
    %v61 = vmax.f32 %v59, -100.0
    %v62 = vmul.f32 %v46, %v52
    %v63 = vmul.f32 %v47, %v53
    %v64 = vsub.f32 1.0, %v46
    %v65 = vsub.f32 1.0, %v47
    %v66 = vmul.f32 %v64, %v60
    %v67 = vmul.f32 %v65, %v61
    %v68 = vadd.f32 %v62, %v66
    %v69 = vadd.f32 %v63, %v67
    %v70 = vsub.f32 0.0, %v68
    %v71 = vsub.f32 0.0, %v69
    %v72 = vadd.f32 %v70, %v71
    %73 = vst [vmem:[#allocation7] sm:$0xff] %v72
    // Predicated region
    $region18: #{tpu_custom_call.1} parent=1 // pred_check
      _
    $region19: #{tpu_custom_call.1} parent=1 // pred_check_branch
      %75 = sbr.rel (0) target = $region21
    $region20: #{tpu_custom_call.1} parent=1 // pred_region
      %77 = vsyncadd [#allocation4], 0
      %s79 = sshll.u32 [#allocation7], 4
      %s80 = int_to_ptr.vmem [resolvable:$true] %s79
      %s81 = sshll.u32 %s2, 4
      %s82 = int_to_ptr.hbm [resolvable:$true] %s81
      %84 = dma.vmem_to_hbm [thread:$0]  %s80, 128, %s82, [#allocation4]
    $region21: #{tpu_custom_call.1} parent=1 // pred_fallthru
      _
    // Predicated region
    $region22: #{tpu_custom_call.1} parent=1 // pred_check
      _
    $region23: #{tpu_custom_call.1} parent=1 // pred_check_branch
      %86 = sbr.rel (0) target = $region25
    $region24: #{tpu_custom_call.1} parent=1 // pred_region
      %88 = dma.done [#allocation4], 128
    $region25: #{tpu_custom_call.1} parent=1 // pred_fallthru
      _
    %89 = vsyncpa [#allocation3], 1
    %90 = vsyncpa [#allocation6], 1
    %91 = vsyncpa [#allocation4], 1

</llo_original>
